<compile_context>
chip_gen: v7x
topology: tpu7x:2x2x1
jax: 0.10.0
libtpu: 0.0.40
codegen_flags: <defaults>
</compile_context>

<pallas_src>
import functools

import jax
import jax.numpy as jnp
from jax import lax
from jax.experimental import pallas as pl
from jax.experimental.pallas import tpu as pltpu

_MASK_VAL = -3.0e38          # finite "minus infinity" for masked vocab lanes
_SEQ_TILE_MAX = 256          # rows per grid step (sublane aligned)
_VOCAB_TILE_MAX = 4096       # lanes per grid step when V is large


# ----------------------------------------------------------------------------
# Fused cross-entropy kernel.
# Grid = (selected_batch, seq_tile, vocab_tile); for every (batch, seq-tile)
# it emits (sum of NLL over valid rows, number of valid rows) using an online
# (flash-style) logsumexp over the vocab tiles.
# ----------------------------------------------------------------------------
def _ce_kernel(bids_ref,                       # scalar prefetch (SMEM)
               logits_ref, tgt_ref,            # inputs  (tseq,tv) / (tseq,1)
               out_ref,                        # output  (1,1,8,256)
               m_ref, l_ref, t_ref,            # VMEM scratch (tseq,1) f32
               *, tv, rem, has_tail):
    del bids_ref                               # only used by the index_maps
    vi = pl.program_id(2)
    n_vi = pl.num_programs(2)

    # Reset the online-LSE state on the first vocab tile of each (s, ti).
    @pl.when(vi == 0)
    def _():
        m_ref[...] = jnp.full(m_ref.shape, _MASK_VAL, jnp.float32)
        l_ref[...] = jnp.zeros_like(l_ref)
        t_ref[...] = jnp.zeros_like(t_ref)

    x = logits_ref[...].astype(jnp.float32)                 # (tseq, tv)
    lane = lax.broadcasted_iota(jnp.int32, x.shape, 1)      # local lane index
    tgt_local = tgt_ref[...] - vi * tv                      # (tseq, 1) int32

    def lse_update(masked):
        # masked path only exists when V % tv != 0 and only runs on the last
        # vocab tile; the bulk of the data takes the unmasked fast path.
        xm = jnp.where(lane < rem, x, _MASK_VAL) if masked else x
        m_prev = m_ref[...]
        m_new = jnp.maximum(m_prev, jnp.max(xm, axis=-1, keepdims=True))
        # exp(_MASK_VAL - finite) == 0 exactly on the TPU EUP, so masked tail
        # lanes contribute nothing without an extra select.
        p = jnp.exp(xm - m_new)
        l_ref[...] = (jnp.exp(m_prev - m_new) * l_ref[...]
                      + jnp.sum(p, axis=-1, keepdims=True))
        m_ref[...] = m_new
        # Target logit: the target column lands in exactly one vocab tile,
        # and ignore rows (tgt == -1) never match any lane.
        t_ref[...] += jnp.sum(jnp.where(lane == tgt_local, x, 0.0),
                              axis=-1, keepdims=True)

    if has_tail:
        @pl.when(vi < n_vi - 1)
        def _():
            lse_update(False)

        @pl.when(vi == n_vi - 1)
        def _():
            lse_update(True)
    else:
        lse_update(False)

    # Epilogue: one cross-sublane reduce + one lane-dense store per (s, ti).
    # Seq-tail / padded rows have tgt == -1, so any garbage logits they read
    # never reach the output (select-based masking, NaN-safe).
    @pl.when(vi == n_vi - 1)
    def _():
        valid = tgt_ref[...] >= 0
        lse = m_ref[...] + jnp.log(l_ref[...])
        nll = jnp.where(valid, lse - t_ref[...], 0.0)
        s_sum = jnp.sum(nll)
        c_sum = jnp.sum(valid.astype(jnp.float32))
        lane_o = lax.broadcasted_iota(jnp.int32, (8, 256), 1)
        out_ref[0, 0] = jnp.where(lane_o < 128, s_sum, c_sum)


def _fused_cross_entropy(logits, batch_ids, tgt_rows):
    """Per-selected-batch (sum of NLL, valid-row count).

    logits:    [B, T, V] in native dtype (read once, cast per tile in-kernel)
    batch_ids: [S] int32  -- which batch row of `logits` each entry uses
    tgt_rows:  [S, T-1] int32 -- target ids, -1 == ignore
    Returns (sums[S], counts[S]) float32.
    """
    B, T, V = logits.shape
    S = int(batch_ids.shape[0])
    assert T >= 2, "need at least two positions for next-token loss"

    tseq = T if T <= _SEQ_TILE_MAX else _SEQ_TILE_MAX
    tv = V if V <= _VOCAB_TILE_MAX else _VOCAB_TILE_MAX
    n_ti = pl.cdiv(T - 1, tseq)
    n_vi = pl.cdiv(V, tv)
    t_pad = n_ti * tseq
    rem = V - (n_vi - 1) * tv                 # valid lanes in last vocab tile
    has_tail = (V % tv) != 0

    # (S, t_pad, 1) int32 target table; -1 == ignore (also covers the dropped
    # last position and any seq-tile tail padding).  The (tseq, 1) block is
    # handed straight to the kernel -- no in-kernel target extraction.
    tgt_tbl = jnp.pad(tgt_rows.astype(jnp.int32),
                      ((0, 0), (0, t_pad - (T - 1))),
                      constant_values=-1)[..., None]

    kernel = functools.partial(_ce_kernel, tv=tv, rem=rem, has_tail=has_tail)

    out = pl.pallas_call(
        kernel,
        out_shape=jax.ShapeDtypeStruct((S, n_ti, 8, 256), jnp.float32),
        grid_spec=pltpu.PrefetchScalarGridSpec(
            num_scalar_prefetch=1,
            grid=(S, n_ti, n_vi),
            in_specs=[
                # Gather the selected batch row directly from the original
                # [B, T, V] logits via the prefetched batch-id table.
                pl.BlockSpec((pl.Squeezed(), tseq, tv),
                             lambda s, ti, vi, b: (b[s], ti, vi)),
                pl.BlockSpec((pl.Squeezed(), tseq, 1),
                             lambda s, ti, vi, b: (s, ti, 0)),
            ],
            out_specs=pl.BlockSpec((1, 1, 8, 256),
                                   lambda s, ti, vi, b: (s, ti, 0, 0)),
            scratch_shapes=[
                pltpu.VMEM((tseq, 1), jnp.float32),   # running max
                pltpu.VMEM((tseq, 1), jnp.float32),   # running sum(exp)
                pltpu.VMEM((tseq, 1), jnp.float32),   # target logit
            ],
        ),
        compiler_params=pltpu.CompilerParams(
            # (s, ti) are independent => shardable across v7x TensorCores.
            dimension_semantics=("parallel", "parallel", "arbitrary"),
            # Big enough for (256, 4096) f32 tiles double-buffered, small
            # enough for v7x's 64 MiB physical VMEM.
            vmem_limit_bytes=48 * 1024 * 1024),
    )(batch_ids.astype(jnp.int32), logits, tgt_tbl)

    sums = jnp.sum(out[:, :, 0, 0], axis=1)      # NLL sum per selected batch
    cnts = jnp.sum(out[:, :, 0, 128], axis=1)    # valid-token count
    return sums, cnts


# ----------------------------------------------------------------------------
# GeneralLLMLoss forward.
# ----------------------------------------------------------------------------
def general_llm_loss(logits, clip_embeds, target_ids, pred_clip_embeds,
                     target_clip_ids, embedding_ids, captioning_ids):
    f32 = jnp.float32
    loss_embedding = f32(0.0)
    loss_caption = f32(0.0)

    n_emb = len(embedding_ids)
    n_cap = len(captioning_ids)
    if n_emb + n_cap == 0:
        return loss_embedding + loss_caption, loss_embedding, loss_caption

    tgt_parts, bid_parts = [], []
    if n_emb > 0:
        emb = jnp.asarray(embedding_ids, jnp.int32)
        te = target_clip_ids[emb, 1:].astype(jnp.int32)
        tgt_parts.append(jnp.where(te == -100, -1, te))    # CE ignore_index=-100
        bid_parts.append(emb)
    if n_cap > 0:
        cap = jnp.asarray(captioning_ids, jnp.int32)
        tc = target_ids[cap].astype(jnp.int32)
        tgt_parts.append(jnp.where(tc == 0, -1, tc))        # CE ignore_index=0
        bid_parts.append(cap)

    sums, cnts = _fused_cross_entropy(logits,
                                      jnp.concatenate(bid_parts, axis=0),
                                      jnp.concatenate(tgt_parts, axis=0))

    if n_emb > 0:
        emb = jnp.asarray(embedding_ids, jnp.int32)
        ce_emb = jnp.sum(sums[:n_emb]) / jnp.sum(cnts[:n_emb])
        # Tiny MSE in plain JAX (a pallas_call here is pure launch overhead).
        mse = jnp.mean((pred_clip_embeds.astype(f32)
                        - clip_embeds[emb].astype(f32)) ** 2)
        loss_embedding = mse + ce_emb
    if n_cap > 0:
        loss_caption = jnp.sum(sums[n_emb:]) / jnp.sum(cnts[n_emb:])

    loss = loss_embedding + loss_caption
    return loss, loss_embedding, loss_caption


# ----------------------------------------------------------------------------
# Pure-JAX reference (self-check).
# ----------------------------------------------------------------------------
def _ref_ce(lg, tg, ignore_index):
    lg = lg.astype(jnp.float32)
    lse = jax.scipy.special.logsumexp(lg, axis=-1)
    tgt = jnp.take_along_axis(lg, tg[:, None], axis=-1)[:, 0]
    valid = tg != ignore_index
    return jnp.sum(jnp.where(valid, lse - tgt, 0.0)) / jnp.sum(valid)


def _ref_forward(logits, clip_embeds, target_ids, pred_clip_embeds,
                 target_clip_ids, embedding_ids, captioning_ids):
    _, _, v = logits.shape
    le = jnp.float32(0.0)
    lc = jnp.float32(0.0)
    if len(embedding_ids) > 0:
        emb = jnp.asarray(embedding_ids, jnp.int32)
        ce = _ref_ce(logits[emb, :-1].reshape(-1, v),
                     target_clip_ids[emb, 1:].reshape(-1), -100)
        mse = jnp.mean((pred_clip_embeds - clip_embeds[emb]) ** 2)
        le = mse + ce
    if len(captioning_ids) > 0:
        cap = jnp.asarray(captioning_ids, jnp.int32)
        lc = _ref_ce(logits[cap, :-1].reshape(-1, v),
                     target_ids[cap].reshape(-1), 0)
    return le + lc, le, lc


if __name__ == "__main__":
    B, T, V, D = 4, 8, 128, 32
    embedding_ids = [0, 2]
    captioning_ids = [1, 3]

    key = jax.random.PRNGKey(0)
    k1, k2, k3, k4, k5 = jax.random.split(key, 5)

    logits = jax.random.normal(k1, (B, T, V), dtype=jnp.float32)
    clip_embeds = jax.random.normal(k2, (B, D), dtype=jnp.float32)
    pred_clip_embeds = jax.random.normal(k3, (len(embedding_ids), D),
                                         dtype=jnp.float32)
    target_ids = jax.random.randint(k4, (B, T - 1), 0, V, dtype=jnp.int32)
    target_clip_ids = jax.random.randint(k5, (B, T), 0, V, dtype=jnp.int32)

    # 1) f32 logits, both loss branches active.
    out = jax.block_until_ready(
        general_llm_loss(logits, clip_embeds, target_ids, pred_clip_embeds,
                         target_clip_ids, embedding_ids, captioning_ids))
    ref = _ref_forward(logits, clip_embeds, target_ids, pred_clip_embeds,
                       target_clip_ids, embedding_ids, captioning_ids)
    for a, b in zip(out, ref):
        assert jnp.allclose(a, b, rtol=1e-4, atol=1e-4), (a, b)

    # 2) native bf16 logits (kernel reads bf16 directly, casts per tile).
    lg_bf16 = logits.astype(jnp.bfloat16)
    out = jax.block_until_ready(
        general_llm_loss(lg_bf16, clip_embeds, target_ids, pred_clip_embeds,
                         target_clip_ids, embedding_ids, captioning_ids))
    ref = _ref_forward(lg_bf16, clip_embeds, target_ids, pred_clip_embeds,
                       target_clip_ids, embedding_ids, captioning_ids)
    for a, b in zip(out, ref):
        assert jnp.allclose(a, b, rtol=5e-3, atol=5e-3), (a, b)

    # 3) captioning-only path (empty embedding id list).
    out = jax.block_until_ready(
        general_llm_loss(logits, clip_embeds, target_ids, pred_clip_embeds,
                         target_clip_ids, [], captioning_ids))
    ref = _ref_forward(logits, clip_embeds, target_ids, pred_clip_embeds,
                       target_clip_ids, [], captioning_ids)
    for a, b in zip(out, ref):
        assert jnp.allclose(a, b, rtol=1e-4, atol=1e-4), (a, b)

    print("KERNEL_OK")
</pallas_src>

<mosaic_0001>
module attributes {stable_mosaic.version = 11 : i64} {
  func.func @_ce_kernel(%arg0: i32, %arg1: i32, %arg2: i32, %arg3: memref<4xi32, #tpu.memory_space<smem>>, %arg4: memref<1x8x128xf32, #tpu.memory_space<vmem>>, %arg5: memref<1x8x1xi32, #tpu.memory_space<vmem>>, %arg6: memref<1x1x8x256xf32, #tpu.memory_space<vmem>>, %arg7: memref<8x1xf32, #tpu.memory_space<vmem>>, %arg8: memref<8x1xf32, #tpu.memory_space<vmem>>, %arg9: memref<8x1xf32, #tpu.memory_space<vmem>>) attributes {dimension_semantics = [#tpu.dimension_semantics<parallel>, #tpu.dimension_semantics<parallel>, #tpu.dimension_semantics<arbitrary>], iteration_bounds = array<i64: 4, 1, 1>, scalar_prefetch = 1 : i64, scratch_operands = 3 : i64, tpu.core_type = #tpu.core_type<tc>, window_params = [{transform_indices = @transform_0, window_bounds = array<i64: 1, 8, 128>}, {transform_indices = @transform_1, window_bounds = array<i64: 1, 8, 1>}, {transform_indices = @transform_2, window_bounds = array<i64: 1, 1, 8, 256>}]} {
    %c0_i32 = arith.constant 0 : i32
    %0 = arith.cmpi eq, %arg2, %c0_i32 : i32
    %1 = arith.extui %0 : i1 to i32
    %c0_i32_0 = arith.constant 0 : i32
    %2 = arith.cmpi ne, %1, %c0_i32_0 : i32
    scf.if %2 {
      %cst_23 = arith.constant -3.000000e+38 : f32
      %39 = vector.broadcast %cst_23 : f32 to vector<8x1xf32>
      %c0_24 = arith.constant 0 : index
      %c0_25 = arith.constant 0 : index
      %40 = vector.load %arg7[%c0_24, %c0_25] : memref<8x1xf32, #tpu.memory_space<vmem>>, vector<8x1xf32>
      tpu.vector_store %arg7[%c0_24, %c0_25], %39 {strides = array<i32>} : memref<8x1xf32, #tpu.memory_space<vmem>>, vector<8x1xf32>,
      %cst_26 = arith.constant 0.000000e+00 : f32
      %41 = vector.broadcast %cst_26 : f32 to vector<8x1xf32>
      %c0_27 = arith.constant 0 : index
      %c0_28 = arith.constant 0 : index
      %42 = vector.load %arg8[%c0_27, %c0_28] : memref<8x1xf32, #tpu.memory_space<vmem>>, vector<8x1xf32>
      tpu.vector_store %arg8[%c0_27, %c0_28], %41 {strides = array<i32>} : memref<8x1xf32, #tpu.memory_space<vmem>>, vector<8x1xf32>,
      %cst_29 = arith.constant 0.000000e+00 : f32
      %43 = vector.broadcast %cst_29 : f32 to vector<8x1xf32>
      %c0_30 = arith.constant 0 : index
      %c0_31 = arith.constant 0 : index
      %44 = vector.load %arg9[%c0_30, %c0_31] : memref<8x1xf32, #tpu.memory_space<vmem>>, vector<8x1xf32>
      tpu.vector_store %arg9[%c0_30, %c0_31], %43 {strides = array<i32>} : memref<8x1xf32, #tpu.memory_space<vmem>>, vector<8x1xf32>,
    } else {
    }
    %c0 = arith.constant 0 : index
    %c0_1 = arith.constant 0 : index
    %c0_2 = arith.constant 0 : index
    %3 = vector.load %arg4[%c0, %c0_1, %c0_2] : memref<1x8x128xf32, #tpu.memory_space<vmem>>, vector<1x8x128xf32>
    %4 = vector.shape_cast %3 : vector<1x8x128xf32> to vector<8x128xf32>
    %5 = tpu.iota {dimensions = array<i32: 1>} : vector<8x128xi32>
    %c0_3 = arith.constant 0 : index
    %c0_4 = arith.constant 0 : index
    %c0_5 = arith.constant 0 : index
    %6 = vector.load %arg5[%c0_3, %c0_4, %c0_5] : memref<1x8x1xi32, #tpu.memory_space<vmem>>, vector<1x8x1xi32>
    %7 = vector.shape_cast %6 : vector<1x8x1xi32> to vector<8x1xi32>
    %c128_i32 = arith.constant 128 : i32
    %8 = arith.muli %arg2, %c128_i32 : i32
    %9 = vector.broadcast %8 : i32 to vector<8x1xi32>
    %10 = arith.subi %7, %9 : vector<8x1xi32>
    %c0_6 = arith.constant 0 : index
    %c0_7 = arith.constant 0 : index
    %11 = vector.load %arg7[%c0_6, %c0_7] : memref<8x1xf32, #tpu.memory_space<vmem>>, vector<8x1xf32>
    %cst = arith.constant dense<0xFF800000> : vector<8xf32>
    %12 = vector.multi_reduction <maximumf>, %4, %cst [1] : vector<8x128xf32> to vector<8xf32>
    %13 = vector.shape_cast %12 : vector<8xf32> to vector<8x1xf32>
    %14 = arith.maximumf %11, %13 : vector<8x1xf32>
    %15 = vector.broadcast %14 : vector<8x1xf32> to vector<8x128xf32>
    %16 = arith.subf %4, %15 : vector<8x128xf32>
    %17 = math.exp %16 : vector<8x128xf32>
    %18 = arith.subf %11, %14 : vector<8x1xf32>
    %19 = math.exp %18 : vector<8x1xf32>
    %c0_8 = arith.constant 0 : index
    %c0_9 = arith.constant 0 : index
    %20 = vector.load %arg8[%c0_8, %c0_9] : memref<8x1xf32, #tpu.memory_space<vmem>>, vector<8x1xf32>
    %21 = arith.mulf %19, %20 : vector<8x1xf32>
    %cst_10 = arith.constant dense<0.000000e+00> : vector<8xf32>
    %22 = vector.multi_reduction <add>, %17, %cst_10 [1] : vector<8x128xf32> to vector<8xf32>
    %23 = vector.shape_cast %22 : vector<8xf32> to vector<8x1xf32>
    %24 = arith.addf %21, %23 : vector<8x1xf32>
    %c0_11 = arith.constant 0 : index
    %c0_12 = arith.constant 0 : index
    %25 = vector.load %arg8[%c0_11, %c0_12] : memref<8x1xf32, #tpu.memory_space<vmem>>, vector<8x1xf32>
    tpu.vector_store %arg8[%c0_11, %c0_12], %24 {strides = array<i32>} : memref<8x1xf32, #tpu.memory_space<vmem>>, vector<8x1xf32>,
    %c0_13 = arith.constant 0 : index
    %c0_14 = arith.constant 0 : index
    %26 = vector.load %arg7[%c0_13, %c0_14] : memref<8x1xf32, #tpu.memory_space<vmem>>, vector<8x1xf32>
    tpu.vector_store %arg7[%c0_13, %c0_14], %14 {strides = array<i32>} : memref<8x1xf32, #tpu.memory_space<vmem>>, vector<8x1xf32>,
    %c0_15 = arith.constant 0 : index
    %c0_16 = arith.constant 0 : index
    %27 = vector.load %arg9[%c0_15, %c0_16] : memref<8x1xf32, #tpu.memory_space<vmem>>, vector<8x1xf32>
    %28 = vector.broadcast %10 : vector<8x1xi32> to vector<8x128xi32>
    %29 = arith.cmpi eq, %5, %28 : vector<8x128xi32>
    %cst_17 = arith.constant 0.000000e+00 : f32
    %30 = vector.broadcast %cst_17 : f32 to vector<8x128xf32>
    %31 = arith.select %29, %4, %30 : vector<8x128xi1>, vector<8x128xf32>
    %cst_18 = arith.constant dense<0.000000e+00> : vector<8xf32>
    %32 = vector.multi_reduction <add>, %31, %cst_18 [1] : vector<8x128xf32> to vector<8xf32>
    %33 = vector.shape_cast %32 : vector<8xf32> to vector<8x1xf32>
    %34 = arith.addf %27, %33 : vector<8x1xf32>
    %c0_19 = arith.constant 0 : index
    %c0_20 = arith.constant 0 : index
    %35 = vector.load %arg9[%c0_19, %c0_20] : memref<8x1xf32, #tpu.memory_space<vmem>>, vector<8x1xf32>
    tpu.vector_store %arg9[%c0_19, %c0_20], %34 {strides = array<i32>} : memref<8x1xf32, #tpu.memory_space<vmem>>, vector<8x1xf32>,
    %c0_i32_21 = arith.constant 0 : i32
    %36 = arith.cmpi eq, %arg2, %c0_i32_21 : i32
    %37 = arith.extui %36 : i1 to i32
    %c0_i32_22 = arith.constant 0 : i32
    %38 = arith.cmpi ne, %37, %c0_i32_22 : i32
    scf.if %38 {
      %c0_23 = arith.constant 0 : index
      %c0_24 = arith.constant 0 : index
      %c0_25 = arith.constant 0 : index
      %39 = vector.load %arg5[%c0_23, %c0_24, %c0_25] : memref<1x8x1xi32, #tpu.memory_space<vmem>>, vector<1x8x1xi32>
      %40 = vector.shape_cast %39 : vector<1x8x1xi32> to vector<8x1xi32>
      %c0_i32_26 = arith.constant 0 : i32
      %41 = vector.broadcast %c0_i32_26 : i32 to vector<8x1xi32>
      %42 = arith.cmpi sge, %40, %41 : vector<8x1xi32>
      %c0_27 = arith.constant 0 : index
      %c0_28 = arith.constant 0 : index
      %43 = vector.load %arg7[%c0_27, %c0_28] : memref<8x1xf32, #tpu.memory_space<vmem>>, vector<8x1xf32>
      %c0_29 = arith.constant 0 : index
      %c0_30 = arith.constant 0 : index
      %44 = vector.load %arg8[%c0_29, %c0_30] : memref<8x1xf32, #tpu.memory_space<vmem>>, vector<8x1xf32>
      %45 = math.log %44 : vector<8x1xf32>
      %46 = arith.addf %43, %45 : vector<8x1xf32>
      %c0_31 = arith.constant 0 : index
      %c0_32 = arith.constant 0 : index
      %47 = vector.load %arg9[%c0_31, %c0_32] : memref<8x1xf32, #tpu.memory_space<vmem>>, vector<8x1xf32>
      %48 = arith.subf %46, %47 : vector<8x1xf32>
      %cst_33 = arith.constant 0.000000e+00 : f32
      %49 = vector.broadcast %cst_33 : f32 to vector<8x1xf32>
      %50 = arith.select %42, %48, %49 : vector<8x1xi1>, vector<8x1xf32>
      %51 = vector.shape_cast %50 : vector<8x1xf32> to vector<1x8x1xf32>
      %cst_34 = arith.constant dense<0.000000e+00> : vector<1xf32>
      %52 = vector.multi_reduction <add>, %51, %cst_34 [1, 2] : vector<1x8x1xf32> to vector<1xf32>
      %53 = vector.shape_cast %52 : vector<1xf32> to vector<1x1x1xf32>
      %54 = vector.extract %53[0, 0, 0] : f32 from vector<1x1x1xf32>
      %55 = arith.extui %42 : vector<8x1xi1> to vector<8x1xi32>
      %56 = arith.sitofp %55 : vector<8x1xi32> to vector<8x1xf32>
      %57 = vector.shape_cast %56 : vector<8x1xf32> to vector<1x8x1xf32>
      %cst_35 = arith.constant dense<0.000000e+00> : vector<1xf32>
      %58 = vector.multi_reduction <add>, %57, %cst_35 [1, 2] : vector<1x8x1xf32> to vector<1xf32>
      %59 = vector.shape_cast %58 : vector<1xf32> to vector<1x1x1xf32>
      %60 = vector.extract %59[0, 0, 0] : f32 from vector<1x1x1xf32>
      %61 = tpu.iota {dimensions = array<i32: 1>} : vector<8x256xi32>
      %c128_i32_36 = arith.constant 128 : i32
      %62 = vector.broadcast %c128_i32_36 : i32 to vector<8x256xi32>
      %63 = arith.cmpi slt, %61, %62 : vector<8x256xi32>
      %64 = vector.broadcast %54 : f32 to vector<8x256xf32>
      %65 = vector.broadcast %60 : f32 to vector<8x256xf32>
      %66 = arith.select %63, %64, %65 : vector<8x256xi1>, vector<8x256xf32>
      %c0_37 = arith.constant 0 : index
      %c0_38 = arith.constant 0 : index
      %c0_39 = arith.constant 0 : index
      %c0_40 = arith.constant 0 : index
      %67 = vector.load %arg6[%c0_37, %c0_38, %c0_39, %c0_40] : memref<1x1x8x256xf32, #tpu.memory_space<vmem>>, vector<1x1x8x256xf32>
      %68 = vector.shape_cast %67 : vector<1x1x8x256xf32> to vector<8x256xf32>
      %69 = vector.shape_cast %66 : vector<8x256xf32> to vector<1x1x8x256xf32>
      tpu.vector_store %arg6[%c0_37, %c0_38, %c0_39, %c0_40], %69 {strides = array<i32>} : memref<1x1x8x256xf32, #tpu.memory_space<vmem>>, vector<1x1x8x256xf32>,
    } else {
    }
    return
  }
  func.func @transform_0(%arg0: i32, %arg1: i32, %arg2: i32, %arg3: memref<4xi32, #tpu.memory_space<smem>>) -> (i32, i32, i32) {
    %0 = arith.index_cast %arg0 : i32 to index
    %1 = memref.load %arg3[%0] : memref<4xi32, #tpu.memory_space<smem>>
    %c0_i32 = arith.constant 0 : i32
    return %1, %arg1, %arg2 : i32, i32, i32
  }
  func.func @transform_1(%arg0: i32, %arg1: i32, %arg2: i32, %arg3: memref<4xi32, #tpu.memory_space<smem>>) -> (i32, i32, i32) {
    %c0_i32 = arith.constant 0 : i32
    %c0_i32_0 = arith.constant 0 : i32
    return %arg0, %arg1, %c0_i32 : i32, i32, i32
  }
  func.func @transform_2(%arg0: i32, %arg1: i32, %arg2: i32, %arg3: memref<4xi32, #tpu.memory_space<smem>>) -> (i32, i32, i32, i32) {
    %c0_i32 = arith.constant 0 : i32
    %c0_i32_0 = arith.constant 0 : i32
    %c0_i32_1 = arith.constant 0 : i32
    return %arg0, %arg1, %c0_i32, %c0_i32_0 : i32, i32, i32, i32
  }
}

</mosaic_0001>

<llo_original>
// kernel: tpu_custom_call.1
$region0: #{tpu_custom_call.1}
  #allocation0 [shape = 'u32[]', space=smem, size = 0x4, offset = 0x4, fixed_abs, tag = 'smem constant byte address 0x4 - core index']
  #allocation1 [shape = 'u32[144,128]{1,0:T(1,128)}', space=vmem, size = 0x12000, scoped, tag = 'internal scratch']
  #allocation2 [shape = 'f32[8,1]{1,0:T(8,128)}', space=vmem, size = 0x1000, scoped, tag = 'scratch operand']
  #allocation3 [shape = 'f32[8,1]{1,0:T(8,128)}', space=vmem, size = 0x1000, scoped, tag = 'scratch operand']
  #allocation4 [shape = 'f32[8,1]{1,0:T(8,128)}', space=vmem, size = 0x1000, scoped, tag = 'scratch operand']
  #allocation5 [shape = 's32[1]{0}', space=sflag, size = 0x4, scoped, tag = 'scoped memory for tpu_custom_call.1']
  #allocation6 [shape = 'u8[512]{0}', space=smem, size = 0x200, scoped, tag = 'prefetched SMEM operand 0']
  %s0 = inlined_call_operand.vmem [shape: s32[4], index: 0, kind: input, shape index: {}]
  %s1 = inlined_call_operand.vmem [shape: f32[4,8,128], index: 1, kind: input, shape index: {}]
  %s2 = inlined_call_operand.vmem [shape: s32[4,8,1], index: 2, kind: input, shape index: {}]
  %s3 = inlined_call_operand.hbm [shape: f32[4,1,8,256], index: 3, kind: output, shape index: {}]
  %s4 = sld [smem:[#allocation0]]
  $region49: #{tpu_custom_call.1} parent=0
    _
  %s6 = ssub.s32 1, %s4
  %s7 = scalar_select 0, %s6, %s4
  %s8 = sshll.u32 %s0, 4
  %s9 = int_to_ptr.vmem [resolvable:$true] %s8
  %11 = dma.vmem_to_smem %s9, 16, [#allocation6], [#allocation5]
  %12 = dma.done [#allocation5], 16
  %13 = sfence
  $region1: #{tpu_custom_call.1} parent=0
    #allocation7 [shape = 'u8[16384]{0}', space=vmem, size = 0x4000, scoped, tag = 'output window, operand 0']
    #allocation8 [shape = 's32[2]{0}', space=sflag, size = 0x8, scoped, tag = 'scoped memory for tpu_custom_call.1']
    %14 = vsyncpa [#allocation8], 0
    %s15 = scalar_lea.sflag [#allocation8], 1
    %16 = vsyncpa %s15, 0
    loop: start=0, step=1, limit=6
    $region2: #{tpu_custom_call.1} parent=1 // loop_pre_header
      _
    $region3: #{tpu_custom_call.1} parent=1 // loop_header
      %s18 = sphi 0, %s22
      %p19 = scmp.ge.s32.totalorder %s18, 6
      %s25 = sphi 0, %s44
      %s26 = sphi 0, %s40
      %s27 = sphi 0, %s36
      %s28 = sphi 0, %s25
      %s29 = sphi 0, %s26
      %s30 = sphi 0, %s27
      %s31 = sphi 0, %s28
      %s32 = sphi 0, %s29
      %s33 = sphi 0, %s30
      %s53 = sphi 0, %s55
      %s56 = sphi 0, %s53
      %s57 = sphi 0, %s56
      %s73 = sphi 0, %s57
      %s81 = sphi 0, %s83
      %s84 = sphi 0, %s81
      %s85 = sphi 0, %s84
      %s101 = sphi 0, %s85
      %s109 = sphi 0, %s111
      %s112 = sphi 0, %s109
      %s113 = sphi 0, %s112
      %s129 = sphi 0, %s113
    $region4: #{tpu_custom_call.1} parent=1 // loop_header_branch
      %21 = sbr.rel (%p19) target = $region8
    $region5: #{tpu_custom_call.1} parent=1 // loop_body
      %s23 = ssub.s32 %s18, 1
      %s24 = ssub.s32 %s18, 2
      %s34 = sadd.s32 1, %s27
      %p35 = scmp.ge.s32.totalorder %s34, 1
      %s36 = scalar_select %p35, 0, %s34
      %s37 = sadd.s32 1, %s26
      %s38 = scalar_select %p35, %s37, %s26
      %p39 = scmp.ge.s32.totalorder %s38, 1
      %s40 = scalar_select %p39, 0, %s38
      %s41 = sadd.s32 1, %s25
      %s42 = scalar_select %p39, %s41, %s25
      %p43 = scmp.ge.s32.totalorder %s42, 4
      %s44 = scalar_select %p43, 0, %s42
      %s45 = sld [smem:[#allocation6 + %s25]]
      %s46 = sld [smem:[#allocation6 + %s44]]
      %s47 = ssub.s32 %s45, %s46
      %s48 = ssub.s32 %s26, %s40
      %s49 = sor.u32 %s47, %s48
      %s50 = ssub.s32 %s27, %s36
      %s51 = sor.u32 %s49, %s50
      %p52 = scmp.eq.s32.totalorder %s51, 0
      %s54 = sadd.s32 %s53, 1
      %s55 = scalar_select %p52, %s53, %s54
      %p58 = pneg %p52
      %p59 = scmp.eq.s32.totalorder %s18, 3
      %p60 = por %p58, %p59
      %p61 = scmp.ne.s32.totalorder %s53, %s56
      %p62 = scmp.eq.s32.totalorder %s18, 0
      %p63 = por %p61, %p62
      %p64 = scmp.ne.s32.totalorder %s53, %s56
      %p65 = scmp.eq.s32.totalorder %s23, 3
      %p66 = por %p64, %p65
      %p67 = scmp.ne.s32.totalorder %s56, %s57
      %p68 = scmp.eq.s32.totalorder %s23, 0
      %p69 = por %p67, %p68
      %p70 = scmp.ne.s32.totalorder %s56, %s57
      %p71 = scmp.eq.s32.totalorder %s24, 3
      %p72 = por %p70, %p71
      %p74 = scmp.ne.s32.totalorder %s57, %s73
      %p75 = scmp.eq.s32.totalorder %s24, 0
      %p76 = por %p74, %p75
      %s77 = ssub.s32 %s25, %s44
      %s78 = ssub.s32 %s26, %s40
      %s79 = sor.u32 %s77, %s78
      %p80 = scmp.eq.s32.totalorder %s79, 0
      %s82 = sadd.s32 %s81, 1
      %s83 = scalar_select %p80, %s81, %s82
      %p86 = pneg %p80
      %p87 = scmp.eq.s32.totalorder %s18, 3
      %p88 = por %p86, %p87
      %p89 = scmp.ne.s32.totalorder %s81, %s84
      %p90 = scmp.eq.s32.totalorder %s18, 0
      %p91 = por %p89, %p90
      %p92 = scmp.ne.s32.totalorder %s81, %s84
      %p93 = scmp.eq.s32.totalorder %s23, 3
      %p94 = por %p92, %p93
      %p95 = scmp.ne.s32.totalorder %s84, %s85
      %p96 = scmp.eq.s32.totalorder %s23, 0
      %p97 = por %p95, %p96
      %p98 = scmp.ne.s32.totalorder %s84, %s85
      %p99 = scmp.eq.s32.totalorder %s24, 3
      %p100 = por %p98, %p99
      %p102 = scmp.ne.s32.totalorder %s85, %s101
      %p103 = scmp.eq.s32.totalorder %s24, 0
      %p104 = por %p102, %p103
      %s105 = ssub.s32 %s25, %s44
      %s106 = ssub.s32 %s26, %s40
      %s107 = sor.u32 %s105, %s106
      %p108 = scmp.eq.s32.totalorder %s107, 0
      %s110 = sadd.s32 %s109, 1
      %s111 = scalar_select %p108, %s109, %s110
      %p114 = pneg %p108
      %p115 = scmp.eq.s32.totalorder %s18, 3
      %p116 = por %p114, %p115
      %p117 = scmp.ne.s32.totalorder %s109, %s112
      %p118 = scmp.eq.s32.totalorder %s18, 0
      %p119 = por %p117, %p118
      %p120 = scmp.ne.s32.totalorder %s109, %s112
      %p121 = scmp.eq.s32.totalorder %s23, 3
      %p122 = por %p120, %p121
      %p123 = scmp.ne.s32.totalorder %s112, %s113
      %p124 = scmp.eq.s32.totalorder %s23, 0
      %p125 = por %p123, %p124
      %p126 = scmp.ne.s32.totalorder %s112, %s113
      %p127 = scmp.eq.s32.totalorder %s24, 3
      %p128 = por %p126, %p127
      %p130 = scmp.ne.s32.totalorder %s113, %s129
      %p131 = scmp.eq.s32.totalorder %s24, 0
      %p132 = por %p130, %p131
      %p133 = scmp.le.s32.totalorder 1, %s18
      %p134 = scmp.lt.s32.totalorder %s18, 5
      %p135 = pnand %p133, %p134
      %p136 = pneg %p135
      // Predicated region
      $region9: #{tpu_custom_call.1} parent=5 // pred_check
        _
      $region10: #{tpu_custom_call.1} parent=5 // pred_check_branch
        %138 = sbr.rel (%p135) target = $region12
      $region11: #{tpu_custom_call.1} parent=5 // pred_region
        %s139 = ssub.s32 %s18, 1
      $region12: #{tpu_custom_call.1} parent=5 // pred_fallthru
        _
      %p140 = scmp.lt.s32.totalorder %s18, 4
      // Predicated region
      $region13: #{tpu_custom_call.1} parent=5 // pred_check
        %p141 = pneg %p140
      $region14: #{tpu_custom_call.1} parent=5 // pred_check_branch
        %143 = sbr.rel (%p141) target = $region16
      $region15: #{tpu_custom_call.1} parent=5 // pred_region
        // Predicated region
        $region17: #{tpu_custom_call.1} parent=15 // pred_check
          %p144 = pneg %p63
        $region18: #{tpu_custom_call.1} parent=15 // pred_check_branch
          %146 = sbr.rel (%p144) target = $region20
        $region19: #{tpu_custom_call.1} parent=15 // pred_region
          %s147 = sld [smem:[#allocation6 + %s25]]
          %p148 = scmp.lt.s32.totalorder %s147, 3
          %s149 = scalar_select %p148, %s147, 3
          %p150 = scmp.lt.s32.totalorder %s26, 0
          %s151 = scalar_select %p150, %s26, 0
          %p152 = scmp.lt.s32.totalorder %s27, 0
          %s153 = scalar_select %p152, %s27, 0
          %s154 = sadd.s32 %s153, %s151
          %s155 = sadd.s32 %s154, %s149
          %s156 = smul.addr %s155, 8
          %s157 = scalar_lea.vmem %s1, %s156
          %s158 = sld [smem:[#allocation6 + %s25]]
        $region20: #{tpu_custom_call.1} parent=15 // pred_fallthru
          _
        // Predicated region
        $region21: #{tpu_custom_call.1} parent=15 // pred_check
          %p159 = pneg %p91
        $region22: #{tpu_custom_call.1} parent=15 // pred_check_branch
          %161 = sbr.rel (%p159) target = $region24
        $region23: #{tpu_custom_call.1} parent=15 // pred_region
          %p162 = scmp.lt.s32.totalorder %s25, 3
          %s163 = scalar_select %p162, %s25, 3
          %p164 = scmp.lt.s32.totalorder %s26, 0
          %s165 = scalar_select %p164, %s26, 0
          %s166 = sadd.s32 %s165, %s163
          %s167 = smul.addr %s166, 8
          %s168 = scalar_lea.vmem %s2, %s167
        $region24: #{tpu_custom_call.1} parent=15 // pred_fallthru
          _
      $region16: #{tpu_custom_call.1} parent=5 // pred_fallthru
        _
      %p169 = scmp.le.s32.totalorder 1, %s18
      %p170 = scmp.lt.s32.totalorder %s18, 5
      %p171 = pnand %p169, %p170
      %p172 = pneg %p171
      // Predicated region
      $region25: #{tpu_custom_call.1} parent=5 // pred_check
        _
      $region26: #{tpu_custom_call.1} parent=5 // pred_check_branch
        %174 = sbr.rel (%p171) target = $region28
      $region27: #{tpu_custom_call.1} parent=5 // pred_region
        %s175 = ssub.s32 %s18, 1
        %s176 = sld [smem:[#allocation6 + %s28]]
        %p177 = scmp.lt.s32.totalorder %s176, 3
        %s178 = scalar_select %p177, %s176, 3
        %p179 = scmp.lt.s32.totalorder %s29, 0
        %s180 = scalar_select %p179, %s29, 0
        %p181 = scmp.lt.s32.totalorder %s30, 0
        %s182 = scalar_select %p181, %s30, 0
        %s183 = sadd.s32 %s182, %s180
        %s184 = sadd.s32 %s183, %s178
        %s185 = smul.addr %s184, 8
        %s186 = scalar_lea.vmem %s1, %s185
        %p187 = pneg %p69
        %p188 = pneg %p66
        %p189 = scmp.lt.s32.totalorder %s28, 3
        %s190 = scalar_select %p189, %s28, 3
        %p191 = scmp.lt.s32.totalorder %s29, 0
        %s192 = scalar_select %p191, %s29, 0
        %s193 = sadd.s32 %s192, %s190
        %s194 = smul.addr %s193, 8
        %s195 = scalar_lea.vmem %s2, %s194
        %p196 = pneg %p97
        %p197 = pneg %p94
        %p198 = pneg %p125
        %p199 = pneg %p122
        %s200 = sand.u32 %s112, 1
        %s201 = scalar_lea.sflag [#allocation8], %s200
        %s202 = sand.u32 %s112, 1
        %s203 = smul.addr %s202, 16
        %s204 = scalar_lea.vmem [#allocation7], %s203
        %s205 = sld [smem:[#allocation6 + %s28]]
        %p206 = scmp.lt.s32.totalorder %s205, 3
        %s207 = scalar_select %p206, %s205, 3
        %p208 = scmp.lt.s32.totalorder %s29, 0
        %s209 = scalar_select %p208, %s29, 0
        %p210 = scmp.lt.s32.totalorder %s30, 0
        %s211 = scalar_select %p210, %s30, 0
        %s212 = sadd.s32 %s211, %s209
        %s213 = sadd.s32 %s212, %s207
        %s214 = smul.addr %s213, 8
        %s215 = scalar_lea.vmem %s1, %s214
        %s216 = sld [smem:[#allocation6 + %s28]]
        %p217 = scmp.lt.s32.totalorder %s28, 3
        %s218 = scalar_select %p217, %s28, 3
        %p219 = scmp.lt.s32.totalorder %s29, 0
        %s220 = scalar_select %p219, %s29, 0
        %s221 = sadd.s32 %s220, %s218
        %s222 = smul.addr %s221, 8
        %s223 = scalar_lea.vmem %s2, %s222
        %p224 = scmp.eq.s32.totalorder %s30, 0
        // Predicated region
        $region29: #{tpu_custom_call.1} parent=27 // pred_check
          %p225 = pneg %p224
        $region30: #{tpu_custom_call.1} parent=27 // pred_check_branch
          %227 = sbr.rel (%p225) target = $region32
        $region31: #{tpu_custom_call.1} parent=27 // pred_region
          %vm228 = vcmask 7168
          %229 = vst.msk [vmem:[#allocation2] sm:$0xff] %vm228, -3e+38
          %230 = vst.msk [vmem:[#allocation3] sm:$0xff] %vm228, 0.0
          %231 = vst.msk [vmem:[#allocation4] sm:$0xff] %vm228, 0.0
        $region32: #{tpu_custom_call.1} parent=27 // pred_fallthru
          _
        %v232 = vld [vmem:[%s215] sm:$0xff]
        %v233 = vlaneseq
        %v234 = vand.u32 %v233, 127
        %v235 = vld [vmem:[%s223] sm:$0xff]
        %s236 = smul.u32 %s30, 128
        %v237 = vstv %s236
        %v238 = vsub.s32 %v235, %v237
        %v239 = vld [vmem:[#allocation2] sm:$0xff]
        %240 = vmax.xlane.f32.xlu0 %v232
        %v241 = vpop.xlane.xlu0 %240
        %v242 = vmax.f32 %v239, %v241
        %244 = vset.pattern.permute.xlu0 0
        %245 = vperm.xlu0 %244, %v242
        %v246 = vpop.permute.xlu0 %245
        %v248 = vsub.f32 %v232, %v246
        %v249 = vmul.f32 %v248, 1.442695
        %v250 = vpow.pop %v249
        %v251 = vsub.f32 %v239, %v242
        %v252 = vmul.f32 %v251, 1.442695
        %v253 = vpow.pop %v252
        %v254 = vld [vmem:[#allocation3] sm:$0xff]
        %v255 = vmul.f32 %v253, %v254
        %256 = vadd.xlane.f32.xlu0 %v250
        %v257 = vpop.xlane.xlu0 %256
        %v258 = vadd.f32 %v255, %v257
        %vm259 = vcmask 7168
        %260 = vst.msk [vmem:[#allocation3] sm:$0xff] %vm259, %v258
        %261 = vst.msk [vmem:[#allocation2] sm:$0xff] %vm259, %v242
        %v262 = vld [vmem:[#allocation4] sm:$0xff]
        %263 = vset.pattern.permute.xlu0 0
        %264 = vperm.xlu0 %263, %v238
        %v265 = vpop.permute.xlu0 %264
        %vm266 = vcmp.eq.s32.totalorder %v234, %v265
        %v267 = vsel %vm266, %v232, 0.0
        %268 = vadd.xlane.f32.xlu0 %v267
        %v269 = vpop.xlane.xlu0 %268
        %v270 = vadd.f32 %v262, %v269
        %271 = vst.msk [vmem:[#allocation4] sm:$0xff] %vm259, %v270
        // Predicated region
        $region33: #{tpu_custom_call.1} parent=27 // pred_check
          %p272 = pneg %p224
        $region34: #{tpu_custom_call.1} parent=27 // pred_check_branch
          %274 = sbr.rel (%p272) target = $region36
        $region35: #{tpu_custom_call.1} parent=27 // pred_region
          %v275 = vld [vmem:[%s223] sm:$0xff]
          %vm276 = vcmp.ge.s32.totalorder %v275, 0
          %v277 = vld [vmem:[#allocation2] sm:$0xff]
          %v278 = vld [vmem:[#allocation3] sm:$0xff]
          %v279 = vlog2.pop %v278
          %v280 = vmul.f32 %v279, 0.6931472
          %v281 = vadd.f32 %v277, %v280
          %v282 = vld [vmem:[#allocation4] sm:$0xff]
          %v283 = vsub.f32 %v281, %v282
          %v284 = vsel %vm276, %v283, 0.0
          %v285 = vsel %vm259, %v284, 0.0
          %286 = vadd.xlane.f32.xlu0 %v285
          %v287 = vpop.xlane.xlu0 %286
          %v288 = vrot.slane %v287, 4
          %v289 = vadd.f32 %v287, %v288
          %v290 = vrot.slane %v289, 2
          %v291 = vadd.f32 %v289, %v290
          %v292 = vrot.slane %v291, 1
          %v293 = vadd.f32 %v291, %v292
          %s294 = vtos %v293
          %v295 = vsel %vm276, 1, 0
          %v296 = vcvt.s32.f32 %v295
          %v297 = vsel %vm259, %v296, 0.0
          %298 = vadd.xlane.f32.xlu0 %v297
          %v299 = vpop.xlane.xlu0 %298
          %v300 = vrot.slane %v299, 4
          %v301 = vadd.f32 %v299, %v300
          %v302 = vrot.slane %v301, 2
          %v303 = vadd.f32 %v301, %v302
          %v304 = vrot.slane %v303, 1
          %v305 = vadd.f32 %v303, %v304
          %s306 = vtos %v305
          %v307 = vadd.s32 %v234, 128
          %vm308 = vcmp.lt.s32.totalorder %v234, 128
          %vm309 = vcmp.lt.s32.totalorder %v307, 128
          %v310 = vstv %s294
          %v311 = vstv %s306
          %v312 = vsel %vm308, %v310, %v311
          %v313 = vsel %vm309, %v310, %v311
          %314 = vst [vmem:[%s204] sm:$0xff] %v312
          %315 = vst [vmem:[%s204 + $0x8] sm:$0xff] %v313
        $region36: #{tpu_custom_call.1} parent=27 // pred_fallthru
          _
        %s316 = sand.u32 %s112, 1
        %s317 = scalar_lea.sflag [#allocation8], %s316
        %s318 = sand.u32 %s112, 1
        %s319 = smul.addr %s318, 16
        %s320 = scalar_lea.vmem [#allocation7], %s319
        // Predicated region
        $region37: #{tpu_custom_call.1} parent=27 // pred_check
          %p321 = pneg %p122
        $region38: #{tpu_custom_call.1} parent=27 // pred_check_branch
          %323 = sbr.rel (%p321) target = $region40
        $region39: #{tpu_custom_call.1} parent=27 // pred_region
          %s325 = ssub.s32 256, 256
          %326 = vsyncadd %s317, %s325
          %s327 = smul.addr %s29, 2
          %s328 = smul.addr %s28, 2
          %s329 = sadd.s32 %s327, %s328
          %s330 = smul.addr %s329, 128
          %s331 = scalar_lea.hbm %s3, %s330
          %s333 = sshll.u32 %s320, 4
          %s334 = int_to_ptr.vmem [resolvable:$true] %s333
          %336 = dma.vmem_to_hbm [thread:$0]  %s334, 256, %s331, %s317
        $region40: #{tpu_custom_call.1} parent=27 // pred_fallthru
          _
      $region28: #{tpu_custom_call.1} parent=5 // pred_fallthru
        _
      %p337 = scmp.le.s32.totalorder 2, %s18
      // Predicated region
      $region41: #{tpu_custom_call.1} parent=5 // pred_check
        %p338 = pneg %p337
      $region42: #{tpu_custom_call.1} parent=5 // pred_check_branch
        %340 = sbr.rel (%p338) target = $region44
      $region43: #{tpu_custom_call.1} parent=5 // pred_region
        %s341 = ssub.s32 %s18, 2
        // Predicated region
        $region45: #{tpu_custom_call.1} parent=43 // pred_check
          %p342 = pneg %p128
        $region46: #{tpu_custom_call.1} parent=43 // pred_check_branch
          %344 = sbr.rel (%p342) target = $region48
        $region47: #{tpu_custom_call.1} parent=43 // pred_region
          %s345 = sand.u32 %s113, 1
          %s346 = scalar_lea.sflag [#allocation8], %s345
          %s347 = sand.u32 %s113, 1
          %s348 = smul.addr %s347, 16
          %s349 = scalar_lea.vmem [#allocation7], %s348
          %350 = dma.done %s346, 256
        $region48: #{tpu_custom_call.1} parent=43 // pred_fallthru
          _
      $region44: #{tpu_custom_call.1} parent=5 // pred_fallthru
        _
    $region6: #{tpu_custom_call.1} parent=1 // loop_footer
      %s22 = sadd.s32 1, %s18
    $region7: #{tpu_custom_call.1} parent=1 // loop_footer_branch
      %17 = sbr.rel target = $region3
    $region8: #{tpu_custom_call.1} parent=1 // loop_exit
      _
    %351 = vsyncpa [#allocation8], 1
    %s352 = scalar_lea.sflag [#allocation8], 1
    %353 = vsyncpa %s352, 1

</llo_original>
